<compile_context>
chip_gen: v5e
topology: v5e:2x2
jax: 0.10.0
libtpu: 0.0.40
codegen_flags: <defaults>
</compile_context>

<pallas_src>
import jax
import jax.numpy as jnp
from jax.experimental import pallas as pl
from jax.experimental.pallas import tpu as pltpu

BN_EPS = 1e-5


def fused_kernel(gate_ref, x_ref, w_ref, gb_ref, o_ref):
    # gate: (1, Cin)    f32   -- squeeze-excite logits
    # x:    (Cin, HW)   f32/bf16 -- channels-first activations, HW on the lane axis
    # w:    (Cout, Cin) f32/bf16 -- 1x1 conv weight (as stored by PyTorch)
    # gb:   (Cout, 2)   f32   -- [:, 0] = gamma, [:, 1] = beta (packed: one DMA)
    # out:  (Cout, HW)
    x = x_ref[...]

    # Fold the sigmoid gate into the *small* weight tile (f32 on the VPU/EUP,
    # then match the activation dtype so the MXU sees homogeneous operands).
    s = jax.nn.sigmoid(gate_ref[...].astype(jnp.float32))            # (1, Cin)
    w_scaled = (w_ref[...].astype(jnp.float32) * s).astype(x.dtype)  # (Cout, Cin)

    # 1x1 conv == plain matmul on the MXU, f32 accumulation.
    y = jnp.dot(w_scaled, x, preferred_element_type=jnp.float32)     # (Cout, HW)

    # Training-mode BatchNorm over the HW axis, single-pass statistics:
    # both reductions are independent (overlap on the XLU), no extra full-tile
    # "y - mean" pass, and the formulation is insensitive to zero lane-padding.
    hw = y.shape[1]
    inv_hw = 1.0 / hw
    y_sum = jnp.sum(y, axis=1, keepdims=True)                        # (Cout, 1)
    y_sqsum = jnp.sum(y * y, axis=1, keepdims=True)                  # (Cout, 1)
    mean = y_sum * inv_hw
    var = jnp.maximum(y_sqsum * inv_hw - mean * mean, 0.0)           # biased var

    gamma = gb_ref[:, 0:1]                                           # (Cout, 1)
    beta = gb_ref[:, 1:2]                                            # (Cout, 1)
    scale = gamma * jax.lax.rsqrt(var + BN_EPS)                      # (Cout, 1)
    shift = beta - mean * scale                                      # (Cout, 1)

    # Single fused multiply-add epilogue over the big tile.
    o_ref[...] = (y * scale + shift).astype(o_ref.dtype)


def sigmoid_mul_conv_bn(x191, x187, conv_w, gamma, beta):
    """x191: (N, Cin, 1, 1), x187: (N, Cin, H, W), conv_w: (Cout, Cin, 1, 1).

    x187 / conv_w may be f32 (module spec) or bf16 (if the producer emits bf16,
    halving the dominant HBM traffic); gamma/beta/x191 are treated as f32.
    """
    N, Cin, H, W = x187.shape
    Cout = conv_w.shape[0]
    HW = H * W
    assert N == 1, "channels-first flattening below assumes a single image"

    # Free reshapes (no transposes, no HBM round-trips).
    x2d = x187.reshape(Cin, HW)
    gate = x191.reshape(1, Cin).astype(jnp.float32)
    w2d = conv_w.reshape(Cout, Cin)
    # Pack gamma/beta into one tiny (Cout, 2) operand: one DMA, one padded tile.
    gb = jnp.stack([gamma.astype(jnp.float32), beta.astype(jnp.float32)], axis=1)

    bytes_x = x2d.size * x2d.dtype.itemsize
    bytes_w = w2d.size * w2d.dtype.itemsize
    cost = pl.CostEstimate(
        flops=2 * HW * Cin * Cout,
        transcendentals=Cin,  # the sigmoid
        bytes_accessed=bytes_x + bytes_w + 4 * (Cin + 2 * Cout) + 4 * Cout * HW,
    )

    vmem = pltpu.MemorySpace.VMEM
    out2d = pl.pallas_call(
        fused_kernel,
        out_shape=jax.ShapeDtypeStruct((Cout, HW), x2d.dtype),
        # No grid: single invocation, whole problem (<1 MiB) resident in VMEM,
        # no pipeline machinery / double buffers for a one-shot kernel.
        in_specs=[
            pl.BlockSpec(memory_space=vmem),   # gate (1, Cin)
            pl.BlockSpec(memory_space=vmem),   # x    (Cin, HW)
            pl.BlockSpec(memory_space=vmem),   # w    (Cout, Cin)
            pl.BlockSpec(memory_space=vmem),   # gb   (Cout, 2)
        ],
        out_specs=pl.BlockSpec(memory_space=vmem),
        cost_estimate=cost,
    )(gate, x2d, w2d, gb)

    # Back to NCHW (free reshape for N == 1).
    return out2d.reshape(N, Cout, H, W)


def _reference(x191, x187, conv_w, gamma, beta):
    """Pure-JAX reference of the PyTorch forward (training-mode BN)."""
    s = jax.nn.sigmoid(x191.astype(jnp.float32))
    xg = s * x187.astype(jnp.float32)
    w = conv_w.astype(jnp.float32)[:, :, 0, 0]
    y = jnp.einsum("oc,nchw->nohw", w, xg)
    mean = y.mean(axis=(0, 2, 3), keepdims=True)
    var = y.var(axis=(0, 2, 3), keepdims=True)  # biased, as used by training BN
    g = gamma.reshape(1, -1, 1, 1).astype(jnp.float32)
    b = beta.reshape(1, -1, 1, 1).astype(jnp.float32)
    return (y - mean) * jax.lax.rsqrt(var + BN_EPS) * g + b


if __name__ == "__main__":
    N, Cin, H, W, Cout = 1, 480, 14, 14, 112

    key = jax.random.PRNGKey(0)
    k1, k2, k3, k4, k5 = jax.random.split(key, 5)

    x187 = jax.random.normal(k1, (N, Cin, H, W), dtype=jnp.float32)
    x191 = jax.random.normal(k2, (N, Cin, 1, 1), dtype=jnp.float32)

    # Conv2d(480, 112, 1x1, bias=False) weight, deterministic init
    conv_w = 0.05 * jax.random.normal(k3, (Cout, Cin, 1, 1), dtype=jnp.float32)
    # BatchNorm2d(112) affine params (default init gamma=1, beta=0; perturbed)
    gamma = 1.0 + 0.1 * jax.random.normal(k4, (Cout,), dtype=jnp.float32)
    beta = 0.1 * jax.random.normal(k5, (Cout,), dtype=jnp.float32)

    out = sigmoid_mul_conv_bn(x191, x187, conv_w, gamma, beta)
    jax.block_until_ready(out)
    assert out.shape == (N, Cout, H, W), out.shape

    ref = _reference(x191, x187, conv_w, gamma, beta)
    max_err = float(jnp.max(jnp.abs(out - ref)))
    assert jnp.allclose(out, ref, rtol=2e-2, atol=2e-2), f"max abs err {max_err}"

    print("KERNEL_OK")
</pallas_src>

<mosaic_0001>
module attributes {stable_mosaic.version = 11 : i64} {
  func.func @fused_kernel(%arg0: memref<1x480xf32, #tpu.memory_space<vmem>>, %arg1: memref<480x196xf32, #tpu.memory_space<vmem>>, %arg2: memref<112x480xf32, #tpu.memory_space<vmem>>, %arg3: memref<112x2xf32, #tpu.memory_space<vmem>>, %arg4: memref<112x196xf32, #tpu.memory_space<vmem>>) attributes {dimension_semantics = [], scalar_prefetch = 0 : i64, scratch_operands = 0 : i64, tpu.core_type = #tpu.core_type<tc>} {
    %c0 = arith.constant 0 : index
    %c0_0 = arith.constant 0 : index
    %0 = vector.load %arg1[%c0, %c0_0] : memref<480x196xf32, #tpu.memory_space<vmem>>, vector<480x196xf32>
    %c0_1 = arith.constant 0 : index
    %c0_2 = arith.constant 0 : index
    %1 = vector.load %arg0[%c0_1, %c0_2] : memref<1x480xf32, #tpu.memory_space<vmem>>, vector<1x480xf32>
    %2 = arith.negf %1 : vector<1x480xf32>
    %3 = math.exp %2 : vector<1x480xf32>
    %cst = arith.constant 1.000000e+00 : f32
    %4 = vector.broadcast %cst : f32 to vector<1x480xf32>
    %5 = arith.addf %4, %3 : vector<1x480xf32>
    %6 = arith.divf %4, %5 : vector<1x480xf32>
    %c0_3 = arith.constant 0 : index
    %c0_4 = arith.constant 0 : index
    %7 = vector.load %arg2[%c0_3, %c0_4] : memref<112x480xf32, #tpu.memory_space<vmem>>, vector<112x480xf32>
    %8 = vector.broadcast %6 : vector<1x480xf32> to vector<112x480xf32>
    %9 = arith.mulf %7, %8 : vector<112x480xf32>
    %cst_5 = arith.constant dense<0.000000e+00> : vector<112x196xf32>
    %10 = tpu.matmul %9, %0, %cst_5 {dimension_numbers = #tpu.dot_dimension_numbers<[1], [0], [0], [1], [0, 0, 1, 1], [], []>} : vector<112x480xf32>, vector<480x196xf32>, vector<112x196xf32> -> vector<112x196xf32>
    %cst_6 = arith.constant dense<0.000000e+00> : vector<112xf32>
    %11 = vector.multi_reduction <add>, %10, %cst_6 [1] : vector<112x196xf32> to vector<112xf32>
    %12 = vector.shape_cast %11 : vector<112xf32> to vector<112x1xf32>
    %13 = arith.mulf %10, %10 : vector<112x196xf32>
    %cst_7 = arith.constant dense<0.000000e+00> : vector<112xf32>
    %14 = vector.multi_reduction <add>, %13, %cst_7 [1] : vector<112x196xf32> to vector<112xf32>
    %15 = vector.shape_cast %14 : vector<112xf32> to vector<112x1xf32>
    %cst_8 = arith.constant 0.00510204071 : f32
    %16 = vector.broadcast %cst_8 : f32 to vector<112x1xf32>
    %17 = arith.mulf %12, %16 : vector<112x1xf32>
    %cst_9 = arith.constant 0.00510204071 : f32
    %18 = vector.broadcast %cst_9 : f32 to vector<112x1xf32>
    %19 = arith.mulf %15, %18 : vector<112x1xf32>
    %20 = arith.mulf %17, %17 : vector<112x1xf32>
    %21 = arith.subf %19, %20 : vector<112x1xf32>
    %cst_10 = arith.constant 0.000000e+00 : f32
    %22 = vector.broadcast %cst_10 : f32 to vector<112x1xf32>
    %23 = arith.maximumf %21, %22 : vector<112x1xf32>
    %c0_11 = arith.constant 0 : index
    %c0_12 = arith.constant 0 : index
    %24 = vector.load %arg3[%c0_11, %c0_12] : memref<112x2xf32, #tpu.memory_space<vmem>>, vector<112x1xf32>
    %c0_13 = arith.constant 0 : index
    %c1 = arith.constant 1 : index
    %25 = vector.load %arg3[%c0_13, %c1] : memref<112x2xf32, #tpu.memory_space<vmem>>, vector<112x1xf32>
    %cst_14 = arith.constant 9.99999974E-6 : f32
    %26 = vector.broadcast %cst_14 : f32 to vector<112x1xf32>
    %27 = arith.addf %23, %26 : vector<112x1xf32>
    %28 = math.rsqrt %27 : vector<112x1xf32>
    %29 = arith.mulf %24, %28 : vector<112x1xf32>
    %30 = arith.mulf %17, %29 : vector<112x1xf32>
    %31 = arith.subf %25, %30 : vector<112x1xf32>
    %32 = vector.broadcast %29 : vector<112x1xf32> to vector<112x196xf32>
    %33 = arith.mulf %10, %32 : vector<112x196xf32>
    %34 = vector.broadcast %31 : vector<112x1xf32> to vector<112x196xf32>
    %35 = arith.addf %33, %34 : vector<112x196xf32>
    %c0_15 = arith.constant 0 : index
    %c0_16 = arith.constant 0 : index
    %36 = vector.load %arg4[%c0_15, %c0_16] : memref<112x196xf32, #tpu.memory_space<vmem>>, vector<112x196xf32>
    tpu.vector_store %arg4[%c0_15, %c0_16], %35 {strides = array<i32>} : memref<112x196xf32, #tpu.memory_space<vmem>>, vector<112x196xf32>,
    return
  }
}

</mosaic_0001>

<llo_original>
// kernel: tpu_custom_call.1
$region0: #{tpu_custom_call.1}
  #allocation0 [shape = 'u32[]', space=smem, size = 0x4, offset = 0x4, fixed_abs, tag = 'smem constant byte address 0x4 - core index']
  #allocation1 [shape = 'u32[72,128]{1,0:T(1,128)}', space=vmem, size = 0x9000, scoped, tag = 'internal scratch']
  %s0 = inlined_call_operand.vmem [shape: f32[1,480], index: 0, kind: input, shape index: {}]
  %s1 = inlined_call_operand.vmem [shape: f32[480,196], index: 1, kind: input, shape index: {}]
  %s2 = inlined_call_operand.vmem [shape: f32[112,480], index: 2, kind: input, shape index: {}]
  %s3 = inlined_call_operand.vmem [shape: f32[112,2], index: 3, kind: input, shape index: {}]
  %s4 = inlined_call_operand.vmem [shape: f32[112,196], index: 4, kind: output, shape index: {}]
  %s5 = sld [smem:[#allocation0]]
  $region26: #{tpu_custom_call.1} parent=0
    _
  %s7 = ssub.s32 1, %s5
  %s8 = scalar_select 0, %s7, %s5
  // Predicated region
  $region2: #{tpu_custom_call.1} parent=0 // pred_check
    _
  $region3: #{tpu_custom_call.1} parent=0 // pred_check_branch
    %10 = sbr.rel (0) target = $region5
  $region4: #{tpu_custom_call.1} parent=0 // pred_region
    _
  $region5: #{tpu_custom_call.1} parent=0 // pred_fallthru
    _
  // Predicated region
  $region6: #{tpu_custom_call.1} parent=0 // pred_check
    _
  $region7: #{tpu_custom_call.1} parent=0 // pred_check_branch
    %12 = sbr.rel (0) target = $region9
  $region8: #{tpu_custom_call.1} parent=0 // pred_region
    _
  $region9: #{tpu_custom_call.1} parent=0 // pred_fallthru
    _
  // Predicated region
  $region10: #{tpu_custom_call.1} parent=0 // pred_check
    _
  $region11: #{tpu_custom_call.1} parent=0 // pred_check_branch
    %14 = sbr.rel (0) target = $region13
  $region12: #{tpu_custom_call.1} parent=0 // pred_region
    _
  $region13: #{tpu_custom_call.1} parent=0 // pred_fallthru
    _
  // Predicated region
  $region14: #{tpu_custom_call.1} parent=0 // pred_check
    _
  $region15: #{tpu_custom_call.1} parent=0 // pred_check_branch
    %16 = sbr.rel (0) target = $region17
  $region16: #{tpu_custom_call.1} parent=0 // pred_region
    _
  $region17: #{tpu_custom_call.1} parent=0 // pred_fallthru
    _
  %v17 = vld [vmem:[%s1] sm:$0xff]
  %v18 = vld [vmem:[%s1 + $0x8] sm:$0xff]
  %v19 = vld [vmem:[%s1 + $0x10] sm:$0xff]
  %v20 = vld [vmem:[%s1 + $0x18] sm:$0xff]
  %v21 = vld [vmem:[%s1 + $0x20] sm:$0xff]
  %v22 = vld [vmem:[%s1 + $0x28] sm:$0xff]
  %v23 = vld [vmem:[%s1 + $0x30] sm:$0xff]
  %v24 = vld [vmem:[%s1 + $0x38] sm:$0xff]
  %v25 = vld [vmem:[%s1 + $0x40] sm:$0xff]
  %v26 = vld [vmem:[%s1 + $0x48] sm:$0xff]
  %v27 = vld [vmem:[%s1 + $0x50] sm:$0xff]
  %v28 = vld [vmem:[%s1 + $0x58] sm:$0xff]
  %v29 = vld [vmem:[%s1 + $0x60] sm:$0xff]
  %v30 = vld [vmem:[%s1 + $0x68] sm:$0xff]
  %v31 = vld [vmem:[%s1 + $0x70] sm:$0xff]
  %v32 = vld [vmem:[%s1 + $0x78] sm:$0xff]
  %v33 = vld [vmem:[%s1 + $0x80] sm:$0xff]
  %v34 = vld [vmem:[%s1 + $0x88] sm:$0xff]
  %v35 = vld [vmem:[%s1 + $0x90] sm:$0xff]
  %v36 = vld [vmem:[%s1 + $0x98] sm:$0xff]
  %v37 = vld [vmem:[%s1 + $0xa0] sm:$0xff]
  %v38 = vld [vmem:[%s1 + $0xa8] sm:$0xff]
  %v39 = vld [vmem:[%s1 + $0xb0] sm:$0xff]
  %v40 = vld [vmem:[%s1 + $0xb8] sm:$0xff]
  %v41 = vld [vmem:[%s1 + $0xc0] sm:$0xff]
  %v42 = vld [vmem:[%s1 + $0xc8] sm:$0xff]
  %v43 = vld [vmem:[%s1 + $0xd0] sm:$0xff]
  %v44 = vld [vmem:[%s1 + $0xd8] sm:$0xff]
  %v45 = vld [vmem:[%s1 + $0xe0] sm:$0xff]
  %v46 = vld [vmem:[%s1 + $0xe8] sm:$0xff]
  %v47 = vld [vmem:[%s1 + $0xf0] sm:$0xff]
  %v48 = vld [vmem:[%s1 + $0xf8] sm:$0xff]
  %v49 = vld [vmem:[%s1 + $0x100] sm:$0xff]
  %v50 = vld [vmem:[%s1 + $0x108] sm:$0xff]
  %v51 = vld [vmem:[%s1 + $0x110] sm:$0xff]
  %v52 = vld [vmem:[%s1 + $0x118] sm:$0xff]
  %v53 = vld [vmem:[%s1 + $0x120] sm:$0xff]
  %v54 = vld [vmem:[%s1 + $0x128] sm:$0xff]
  %v55 = vld [vmem:[%s1 + $0x130] sm:$0xff]
  %v56 = vld [vmem:[%s1 + $0x138] sm:$0xff]
  %v57 = vld [vmem:[%s1 + $0x140] sm:$0xff]
  %v58 = vld [vmem:[%s1 + $0x148] sm:$0xff]
  %v59 = vld [vmem:[%s1 + $0x150] sm:$0xff]
  %v60 = vld [vmem:[%s1 + $0x158] sm:$0xff]
  %v61 = vld [vmem:[%s1 + $0x160] sm:$0xff]
  %v62 = vld [vmem:[%s1 + $0x168] sm:$0xff]
  %v63 = vld [vmem:[%s1 + $0x170] sm:$0xff]
  %v64 = vld [vmem:[%s1 + $0x178] sm:$0xff]
  %v65 = vld [vmem:[%s1 + $0x180] sm:$0xff]
  %v66 = vld [vmem:[%s1 + $0x188] sm:$0xff]
  %v67 = vld [vmem:[%s1 + $0x190] sm:$0xff]
  %v68 = vld [vmem:[%s1 + $0x198] sm:$0xff]
  %v69 = vld [vmem:[%s1 + $0x1a0] sm:$0xff]
  %v70 = vld [vmem:[%s1 + $0x1a8] sm:$0xff]
  %v71 = vld [vmem:[%s1 + $0x1b0] sm:$0xff]
  %v72 = vld [vmem:[%s1 + $0x1b8] sm:$0xff]
  %v73 = vld [vmem:[%s1 + $0x1c0] sm:$0xff]
  %v74 = vld [vmem:[%s1 + $0x1c8] sm:$0xff]
  %v75 = vld [vmem:[%s1 + $0x1d0] sm:$0xff]
  %v76 = vld [vmem:[%s1 + $0x1d8] sm:$0xff]
  %v77 = vld [vmem:[%s1 + $0x1e0] sm:$0xff]
  %v78 = vld [vmem:[%s1 + $0x1e8] sm:$0xff]
  %v79 = vld [vmem:[%s1 + $0x1f0] sm:$0xff]
  %v80 = vld [vmem:[%s1 + $0x1f8] sm:$0xff]
  %v81 = vld [vmem:[%s1 + $0x200] sm:$0xff]
  %v82 = vld [vmem:[%s1 + $0x208] sm:$0xff]
  %v83 = vld [vmem:[%s1 + $0x210] sm:$0xff]
  %v84 = vld [vmem:[%s1 + $0x218] sm:$0xff]
  %v85 = vld [vmem:[%s1 + $0x220] sm:$0xff]
  %v86 = vld [vmem:[%s1 + $0x228] sm:$0xff]
  %v87 = vld [vmem:[%s1 + $0x230] sm:$0xff]
  %v88 = vld [vmem:[%s1 + $0x238] sm:$0xff]
  %v89 = vld [vmem:[%s1 + $0x240] sm:$0xff]
  %v90 = vld [vmem:[%s1 + $0x248] sm:$0xff]
  %v91 = vld [vmem:[%s1 + $0x250] sm:$0xff]
  %v92 = vld [vmem:[%s1 + $0x258] sm:$0xff]
  %v93 = vld [vmem:[%s1 + $0x260] sm:$0xff]
  %v94 = vld [vmem:[%s1 + $0x268] sm:$0xff]
  %v95 = vld [vmem:[%s1 + $0x270] sm:$0xff]
  %v96 = vld [vmem:[%s1 + $0x278] sm:$0xff]
  %v97 = vld [vmem:[%s1 + $0x280] sm:$0xff]
  %v98 = vld [vmem:[%s1 + $0x288] sm:$0xff]
  %v99 = vld [vmem:[%s1 + $0x290] sm:$0xff]
  %v100 = vld [vmem:[%s1 + $0x298] sm:$0xff]
  %v101 = vld [vmem:[%s1 + $0x2a0] sm:$0xff]
  %v102 = vld [vmem:[%s1 + $0x2a8] sm:$0xff]
  %v103 = vld [vmem:[%s1 + $0x2b0] sm:$0xff]
  %v104 = vld [vmem:[%s1 + $0x2b8] sm:$0xff]
  %v105 = vld [vmem:[%s1 + $0x2c0] sm:$0xff]
  %v106 = vld [vmem:[%s1 + $0x2c8] sm:$0xff]
  %v107 = vld [vmem:[%s1 + $0x2d0] sm:$0xff]
  %v108 = vld [vmem:[%s1 + $0x2d8] sm:$0xff]
  %v109 = vld [vmem:[%s1 + $0x2e0] sm:$0xff]
  %v110 = vld [vmem:[%s1 + $0x2e8] sm:$0xff]
  %v111 = vld [vmem:[%s1 + $0x2f0] sm:$0xff]
  %v112 = vld [vmem:[%s1 + $0x2f8] sm:$0xff]
  %v113 = vld [vmem:[%s1 + $0x300] sm:$0xff]
  %v114 = vld [vmem:[%s1 + $0x308] sm:$0xff]
  %v115 = vld [vmem:[%s1 + $0x310] sm:$0xff]
  %v116 = vld [vmem:[%s1 + $0x318] sm:$0xff]
  %v117 = vld [vmem:[%s1 + $0x320] sm:$0xff]
  %v118 = vld [vmem:[%s1 + $0x328] sm:$0xff]
  %v119 = vld [vmem:[%s1 + $0x330] sm:$0xff]
  %v120 = vld [vmem:[%s1 + $0x338] sm:$0xff]
  %v121 = vld [vmem:[%s1 + $0x340] sm:$0xff]
  %v122 = vld [vmem:[%s1 + $0x348] sm:$0xff]
  %v123 = vld [vmem:[%s1 + $0x350] sm:$0xff]
  %v124 = vld [vmem:[%s1 + $0x358] sm:$0xff]
  %v125 = vld [vmem:[%s1 + $0x360] sm:$0xff]
  %v126 = vld [vmem:[%s1 + $0x368] sm:$0xff]
  %v127 = vld [vmem:[%s1 + $0x370] sm:$0xff]
  %v128 = vld [vmem:[%s1 + $0x378] sm:$0xff]
  %v129 = vld [vmem:[%s1 + $0x380] sm:$0xff]
  %v130 = vld [vmem:[%s1 + $0x388] sm:$0xff]
  %v131 = vld [vmem:[%s1 + $0x390] sm:$0xff]
  %v132 = vld [vmem:[%s1 + $0x398] sm:$0xff]
  %v133 = vld [vmem:[%s1 + $0x3a0] sm:$0xff]
  %v134 = vld [vmem:[%s1 + $0x3a8] sm:$0xff]
  %v135 = vld [vmem:[%s1 + $0x3b0] sm:$0xff]
  %v136 = vld [vmem:[%s1 + $0x3b8] sm:$0xff]
  %v137 = vld [vmem:[%s0] sm:$0xf]
  %v138 = vxor.u32 %v137, 2147483648
  %v139 = vmul.f32 %v138, 1.442695
  %v140 = vpow.pop %v139
  %v141 = vadd.f32 %v140, 1.0
  %v142 = vrcp.pop %v141
  %v143 = vmul.f32 %v141, %v142
  %v144 = vsub.f32 1.0, %v143
  %v145 = vmul.f32 %v142, %v144
  %v146 = vadd.f32 %v142, %v145
  %vm147 = vweird.f32 %v141
  %vm148 = vweird.f32 %v142
  %vm149 = vmor %vm147, %vm148
  %v150 = vsel %vm149, %v142, %v146
  %v151 = vand.u32 2147483647, %v141
  %vm152 = vcmp.eq.f32.partialorder %v151, 8.507059e+37
  %v153 = vand.u32 %v141, 2147483648
  %v154 = vor.u32 1.1754944e-38, %v153
  %v155 = vsel %vm152, %v154, %v150
  %v156 = vmul.f32 1.0, %v155
  %v157 = vld [vmem:[%s2] sm:$0xff]
  %v158 = vld [vmem:[%s2 + $0x8] sm:$0xff]
  %v159 = vld [vmem:[%s2 + $0x10] sm:$0xff]
  %v160 = vld [vmem:[%s2 + $0x18] sm:$0xff]
  %v161 = vld [vmem:[%s2 + $0x20] sm:$0xff]
  %v162 = vld [vmem:[%s2 + $0x28] sm:$0xff]
  %v163 = vld [vmem:[%s2 + $0x30] sm:$0xff]
  %v164 = vld [vmem:[%s2 + $0x38] sm:$0xff]
  %v165 = vld [vmem:[%s2 + $0x40] sm:$0xff]
  %v166 = vld [vmem:[%s2 + $0x48] sm:$0xff]
  %v167 = vld [vmem:[%s2 + $0x50] sm:$0xff]
  %v168 = vld [vmem:[%s2 + $0x58] sm:$0xff]
  %v169 = vld [vmem:[%s2 + $0x60] sm:$0xff]
  %v170 = vld [vmem:[%s2 + $0x68] sm:$0xff]
  %v171 = vld [vmem:[%s2 + $0x70] sm:$0xff]
  %v172 = vld [vmem:[%s2 + $0x78] sm:$0xff]
  %v173 = vld [vmem:[%s2 + $0x80] sm:$0xff]
  %v174 = vld [vmem:[%s2 + $0x88] sm:$0xff]
  %v175 = vld [vmem:[%s2 + $0x90] sm:$0xff]
  %v176 = vld [vmem:[%s2 + $0x98] sm:$0xff]
  %v177 = vld [vmem:[%s2 + $0xa0] sm:$0xff]
  %v178 = vld [vmem:[%s2 + $0xa8] sm:$0xff]
  %v179 = vld [vmem:[%s2 + $0xb0] sm:$0xff]
  %v180 = vld [vmem:[%s2 + $0xb8] sm:$0xff]
  %v181 = vld [vmem:[%s2 + $0xc0] sm:$0xff]
  %v182 = vld [vmem:[%s2 + $0xc8] sm:$0xff]
  %v183 = vld [vmem:[%s2 + $0xd0] sm:$0xff]
  %v184 = vld [vmem:[%s2 + $0xd8] sm:$0xff]
  %v185 = vld [vmem:[%s2 + $0xe0] sm:$0xff]
  %v186 = vld [vmem:[%s2 + $0xe8] sm:$0xff]
  %v187 = vld [vmem:[%s2 + $0xf0] sm:$0xff]
  %v188 = vld [vmem:[%s2 + $0xf8] sm:$0xff]
  %v189 = vld [vmem:[%s2 + $0x100] sm:$0xff]
  %v190 = vld [vmem:[%s2 + $0x108] sm:$0xff]
  %v191 = vld [vmem:[%s2 + $0x110] sm:$0xff]
  %v192 = vld [vmem:[%s2 + $0x118] sm:$0xff]
  %v193 = vld [vmem:[%s2 + $0x120] sm:$0xff]
  %v194 = vld [vmem:[%s2 + $0x128] sm:$0xff]
  %v195 = vld [vmem:[%s2 + $0x130] sm:$0xff]
  %v196 = vld [vmem:[%s2 + $0x138] sm:$0xff]
  %v197 = vld [vmem:[%s2 + $0x140] sm:$0xff]
  %v198 = vld [vmem:[%s2 + $0x148] sm:$0xff]
  %v199 = vld [vmem:[%s2 + $0x150] sm:$0xff]
  %v200 = vld [vmem:[%s2 + $0x158] sm:$0xff]
  %v201 = vld [vmem:[%s2 + $0x160] sm:$0xff]
  %v202 = vld [vmem:[%s2 + $0x168] sm:$0xff]
  %v203 = vld [vmem:[%s2 + $0x170] sm:$0xff]
  %v204 = vld [vmem:[%s2 + $0x178] sm:$0xff]
  %v205 = vld [vmem:[%s2 + $0x180] sm:$0xff]
  %v206 = vld [vmem:[%s2 + $0x188] sm:$0xff]
  %v207 = vld [vmem:[%s2 + $0x190] sm:$0xff]
  %v208 = vld [vmem:[%s2 + $0x198] sm:$0xff]
  %v209 = vld [vmem:[%s2 + $0x1a0] sm:$0xff]
  %v210 = vld [vmem:[%s2 + $0x1a8] sm:$0xff]
  %v211 = vld [vmem:[%s2 + $0x1b0] sm:$0xff]
  %v212 = vld [vmem:[%s2 + $0x1b8] sm:$0xff]
  %v214 = vperm.slane %v156, 0
  %v215 = vperm.slane %v156, 1
  %v216 = vperm.slane %v156, 2
  %v217 = vperm.slane %v156, 3
  %v222 = vmul.f32 %v157, %v214
  %v223 = vmul.f32 %v158, %v215
  %v224 = vmul.f32 %v159, %v216
  %v225 = vmul.f32 %v160, %v217
  %v226 = vmul.f32 %v161, %v214
  %v227 = vmul.f32 %v162, %v215
  %v228 = vmul.f32 %v163, %v216
  %v229 = vmul.f32 %v164, %v217
  %v230 = vmul.f32 %v165, %v214
  %v231 = vmul.f32 %v166, %v215
  %v232 = vmul.f32 %v167, %v216
  %v233 = vmul.f32 %v168, %v217
  %v234 = vmul.f32 %v169, %v214
  %v235 = vmul.f32 %v170, %v215
  %v236 = vmul.f32 %v171, %v216
  %v237 = vmul.f32 %v172, %v217
  %v238 = vmul.f32 %v173, %v214
  %v239 = vmul.f32 %v174, %v215
  %v240 = vmul.f32 %v175, %v216
  %v241 = vmul.f32 %v176, %v217
  %v242 = vmul.f32 %v177, %v214
  %v243 = vmul.f32 %v178, %v215
  %v244 = vmul.f32 %v179, %v216
  %v245 = vmul.f32 %v180, %v217
  %v246 = vmul.f32 %v181, %v214
  %v247 = vmul.f32 %v182, %v215
  %v248 = vmul.f32 %v183, %v216
  %v249 = vmul.f32 %v184, %v217
  %v250 = vmul.f32 %v185, %v214
  %v251 = vmul.f32 %v186, %v215
  %v252 = vmul.f32 %v187, %v216
  %v253 = vmul.f32 %v188, %v217
  %v254 = vmul.f32 %v189, %v214
  %v255 = vmul.f32 %v190, %v215
  %v256 = vmul.f32 %v191, %v216
  %v257 = vmul.f32 %v192, %v217
  %v258 = vmul.f32 %v193, %v214
  %v259 = vmul.f32 %v194, %v215
  %v260 = vmul.f32 %v195, %v216
  %v261 = vmul.f32 %v196, %v217
  %v262 = vmul.f32 %v197, %v214
  %v263 = vmul.f32 %v198, %v215
  %v264 = vmul.f32 %v199, %v216
  %v265 = vmul.f32 %v200, %v217
  %v266 = vmul.f32 %v201, %v214
  %v267 = vmul.f32 %v202, %v215
  %v268 = vmul.f32 %v203, %v216
  %v269 = vmul.f32 %v204, %v217
  %v270 = vmul.f32 %v205, %v214
  %v271 = vmul.f32 %v206, %v215
  %v272 = vmul.f32 %v207, %v216
  %v273 = vmul.f32 %v208, %v217
  %v274 = vmul.f32 %v209, %v214
  %v275 = vmul.f32 %v210, %v215
  %v276 = vmul.f32 %v211, %v216
  %v277 = vmul.f32 %v212, %v217
  %vm278 = vcmask 785408
  %v280 = vsel %vm278, %v225, 0
  %v283 = vsel %vm278, %v229, 0
  %v286 = vsel %vm278, %v233, 0
  %v289 = vsel %vm278, %v237, 0
  %v292 = vsel %vm278, %v241, 0
  %v295 = vsel %vm278, %v245, 0
  %v298 = vsel %vm278, %v249, 0
  %v301 = vsel %vm278, %v253, 0
  %v304 = vsel %vm278, %v257, 0
  %v307 = vsel %vm278, %v261, 0
  %v310 = vsel %vm278, %v265, 0
  %v313 = vsel %vm278, %v269, 0
  %v316 = vsel %vm278, %v273, 0
  %v319 = vsel %vm278, %v277, 0
  %321 = vmatpush.msra.mxu0 %v47
  %322 = vmatpush.msra.mxu0 %v45
  %323 = vmatpush.msra.mxu0 %v43
  %324 = vmatpush.msra.mxu0 %v41
  %325 = vmatpush.msra.mxu0 %v39
  %326 = vmatpush.msra.mxu0 %v37
  %327 = vmatpush.msra.mxu0 %v35
  %328 = vmatpush.msra.mxu0 %v33
  %329 = vmatpush.msra.mxu0 %v31
  %330 = vmatpush.msra.mxu0 %v29
  %331 = vmatpush.msra.mxu0 %v27
  %332 = vmatpush.msra.mxu0 %v25
  %333 = vmatpush.msra.mxu0 %v23
  %334 = vmatpush.msra.mxu0 %v21
  %335 = vmatpush.msra.mxu0 %v19
  %336 = vmatpush.msra.mxu0 %v17
  %337 = vmatmul.f32.gmra.mxu0 %v222
  %v338 = vpop.f32.mrf.mxu0
  %v339 = vadd.f32 0.0, %v338
  %340 = vmatmul.f32.gmra.mxu0 %v226
  %v341 = vpop.f32.mrf.mxu0
  %v342 = vadd.f32 0.0, %v341
  %343 = vmatmul.f32.gmra.mxu0 %v230
  %v344 = vpop.f32.mrf.mxu0
  %v345 = vadd.f32 0.0, %v344
  %346 = vmatmul.f32.gmra.mxu0 %v234
  %v347 = vpop.f32.mrf.mxu0
  %v348 = vadd.f32 0.0, %v347
  %349 = vmatmul.f32.gmra.mxu0 %v238
  %v350 = vpop.f32.mrf.mxu0
  %v351 = vadd.f32 0.0, %v350
  %352 = vmatmul.f32.gmra.mxu0 %v242
  %v353 = vpop.f32.mrf.mxu0
  %v354 = vadd.f32 0.0, %v353
  %355 = vmatmul.f32.gmra.mxu0 %v246
  %v356 = vpop.f32.mrf.mxu0
  %v357 = vadd.f32 0.0, %v356
  %358 = vmatmul.f32.gmra.mxu0 %v250
  %v359 = vpop.f32.mrf.mxu0
  %v360 = vadd.f32 0.0, %v359
  %361 = vmatmul.f32.gmra.mxu0 %v254
  %v362 = vpop.f32.mrf.mxu0
  %v363 = vadd.f32 0.0, %v362
  %364 = vmatmul.f32.gmra.mxu0 %v258
  %v365 = vpop.f32.mrf.mxu0
  %v366 = vadd.f32 0.0, %v365
  %367 = vmatmul.f32.gmra.mxu0 %v262
  %v368 = vpop.f32.mrf.mxu0
  %v369 = vadd.f32 0.0, %v368
  %370 = vmatmul.f32.gmra.mxu0 %v266
  %v371 = vpop.f32.mrf.mxu0
  %v372 = vadd.f32 0.0, %v371
  %373 = vmatmul.f32.gmra.mxu0 %v270
  %v374 = vpop.f32.mrf.mxu0
  %v375 = vadd.f32 0.0, %v374
  %376 = vmatmul.f32.gmra.mxu0 %v274
  %v377 = vpop.f32.mrf.mxu0
  %v378 = vadd.f32 0.0, %v377
  %379 = vdwg.mxu0
  %380 = vmatpush.msra.mxu0 %v79
  %381 = vmatpush.msra.mxu0 %v77
  %382 = vmatpush.msra.mxu0 %v75
  %383 = vmatpush.msra.mxu0 %v73
  %384 = vmatpush.msra.mxu0 %v71
  %385 = vmatpush.msra.mxu0 %v69
  %386 = vmatpush.msra.mxu0 %v67
  %387 = vmatpush.msra.mxu0 %v65
  %388 = vmatpush.msra.mxu0 %v63
  %389 = vmatpush.msra.mxu0 %v61
  %390 = vmatpush.msra.mxu0 %v59
  %391 = vmatpush.msra.mxu0 %v57
  %392 = vmatpush.msra.mxu0 %v55
  %393 = vmatpush.msra.mxu0 %v53
  %394 = vmatpush.msra.mxu0 %v51
  %395 = vmatpush.msra.mxu0 %v49
  %396 = vmatmul.f32.gmra.mxu0 %v223
  %v397 = vpop.f32.mrf.mxu0
  %v398 = vadd.f32 %v339, %v397
  %399 = vmatmul.f32.gmra.mxu0 %v227
  %v400 = vpop.f32.mrf.mxu0
  %v401 = vadd.f32 %v342, %v400
  %402 = vmatmul.f32.gmra.mxu0 %v231
  %v403 = vpop.f32.mrf.mxu0
  %v404 = vadd.f32 %v345, %v403
  %405 = vmatmul.f32.gmra.mxu0 %v235
  %v406 = vpop.f32.mrf.mxu0
  %v407 = vadd.f32 %v348, %v406
  %408 = vmatmul.f32.gmra.mxu0 %v239
  %v409 = vpop.f32.mrf.mxu0
  %v410 = vadd.f32 %v351, %v409
  %411 = vmatmul.f32.gmra.mxu0 %v243
  %v412 = vpop.f32.mrf.mxu0
  %v413 = vadd.f32 %v354, %v412
  %414 = vmatmul.f32.gmra.mxu0 %v247
  %v415 = vpop.f32.mrf.mxu0
  %v416 = vadd.f32 %v357, %v415
  %417 = vmatmul.f32.gmra.mxu0 %v251
  %v418 = vpop.f32.mrf.mxu0
  %v419 = vadd.f32 %v360, %v418
  %420 = vmatmul.f32.gmra.mxu0 %v255
  %v421 = vpop.f32.mrf.mxu0
  %v422 = vadd.f32 %v363, %v421
  %423 = vmatmul.f32.gmra.mxu0 %v259
  %v424 = vpop.f32.mrf.mxu0
  %v425 = vadd.f32 %v366, %v424
  %426 = vmatmul.f32.gmra.mxu0 %v263
  %v427 = vpop.f32.mrf.mxu0
  %v428 = vadd.f32 %v369, %v427
  %429 = vmatmul.f32.gmra.mxu0 %v267
  %v430 = vpop.f32.mrf.mxu0
  %v431 = vadd.f32 %v372, %v430
  %432 = vmatmul.f32.gmra.mxu0 %v271
  %v433 = vpop.f32.mrf.mxu0
  %v434 = vadd.f32 %v375, %v433
  %435 = vmatmul.f32.gmra.mxu0 %v275
  %v436 = vpop.f32.mrf.mxu0
  %v437 = vadd.f32 %v378, %v436
  %438 = vdwg.mxu0
  %439 = vmatpush.msra.mxu0 %v111
  %440 = vmatpush.msra.mxu0 %v109
  %441 = vmatpush.msra.mxu0 %v107
  %442 = vmatpush.msra.mxu0 %v105
  %443 = vmatpush.msra.mxu0 %v103
  %444 = vmatpush.msra.mxu0 %v101
  %445 = vmatpush.msra.mxu0 %v99
  %446 = vmatpush.msra.mxu0 %v97
  %447 = vmatpush.msra.mxu0 %v95
  %448 = vmatpush.msra.mxu0 %v93
  %449 = vmatpush.msra.mxu0 %v91
  %450 = vmatpush.msra.mxu0 %v89
  %451 = vmatpush.msra.mxu0 %v87
  %452 = vmatpush.msra.mxu0 %v85
  %453 = vmatpush.msra.mxu0 %v83
  %454 = vmatpush.msra.mxu0 %v81
  %455 = vmatmul.f32.gmra.mxu0 %v224
  %v456 = vpop.f32.mrf.mxu0
  %v457 = vadd.f32 %v398, %v456
  %458 = vmatmul.f32.gmra.mxu0 %v228
  %v459 = vpop.f32.mrf.mxu0
  %v460 = vadd.f32 %v401, %v459
  %461 = vmatmul.f32.gmra.mxu0 %v232
  %v462 = vpop.f32.mrf.mxu0
  %v463 = vadd.f32 %v404, %v462
  %464 = vmatmul.f32.gmra.mxu0 %v236
  %v465 = vpop.f32.mrf.mxu0
  %v466 = vadd.f32 %v407, %v465
  %467 = vmatmul.f32.gmra.mxu0 %v240
  %v468 = vpop.f32.mrf.mxu0
  %v469 = vadd.f32 %v410, %v468
  %470 = vmatmul.f32.gmra.mxu0 %v244
  %v471 = vpop.f32.mrf.mxu0
  %v472 = vadd.f32 %v413, %v471
  %473 = vmatmul.f32.gmra.mxu0 %v248
  %v474 = vpop.f32.mrf.mxu0
  %v475 = vadd.f32 %v416, %v474
  %476 = vmatmul.f32.gmra.mxu0 %v252
  %v477 = vpop.f32.mrf.mxu0
  %v478 = vadd.f32 %v419, %v477
  %479 = vmatmul.f32.gmra.mxu0 %v256
  %v480 = vpop.f32.mrf.mxu0
  %v481 = vadd.f32 %v422, %v480
  %482 = vmatmul.f32.gmra.mxu0 %v260
  %v483 = vpop.f32.mrf.mxu0
  %v484 = vadd.f32 %v425, %v483
  %485 = vmatmul.f32.gmra.mxu0 %v264
  %v486 = vpop.f32.mrf.mxu0
  %v487 = vadd.f32 %v428, %v486
  %488 = vmatmul.f32.gmra.mxu0 %v268
  %v489 = vpop.f32.mrf.mxu0
  %v490 = vadd.f32 %v431, %v489
  %491 = vmatmul.f32.gmra.mxu0 %v272
  %v492 = vpop.f32.mrf.mxu0
  %v493 = vadd.f32 %v434, %v492
  %494 = vmatmul.f32.gmra.mxu0 %v276
  %v495 = vpop.f32.mrf.mxu0
  %v496 = vadd.f32 %v437, %v495
  %497 = vdwg.mxu0
  %498 = vmatpush.msra.mxu0 0.0
  %499 = vmatpush.msra.mxu0 0.0
  %500 = vmatpush.msra.mxu0 0.0
  %501 = vmatpush.msra.mxu0 0.0
  %502 = vmatpush.msra.mxu0 %v135
  %503 = vmatpush.msra.mxu0 %v133
  %504 = vmatpush.msra.mxu0 %v131
  %505 = vmatpush.msra.mxu0 %v129
  %506 = vmatpush.msra.mxu0 %v127
  %507 = vmatpush.msra.mxu0 %v125
  %508 = vmatpush.msra.mxu0 %v123
  %509 = vmatpush.msra.mxu0 %v121
  %510 = vmatpush.msra.mxu0 %v119
  %511 = vmatpush.msra.mxu0 %v117
  %512 = vmatpush.msra.mxu0 %v115
  %513 = vmatpush.msra.mxu0 %v113
  %514 = vmatmul.f32.gmra.mxu0 %v280
  %v515 = vpop.f32.mrf.mxu0
  %v516 = vadd.f32 %v457, %v515
  %517 = vmatmul.f32.gmra.mxu0 %v283
  %v518 = vpop.f32.mrf.mxu0
  %v519 = vadd.f32 %v460, %v518
  %520 = vmatmul.f32.gmra.mxu0 %v286
  %v521 = vpop.f32.mrf.mxu0
  %v522 = vadd.f32 %v463, %v521
  %523 = vmatmul.f32.gmra.mxu0 %v289
  %v524 = vpop.f32.mrf.mxu0
  %v525 = vadd.f32 %v466, %v524
  %526 = vmatmul.f32.gmra.mxu0 %v292
  %v527 = vpop.f32.mrf.mxu0
  %v528 = vadd.f32 %v469, %v527
  %529 = vmatmul.f32.gmra.mxu0 %v295
  %v530 = vpop.f32.mrf.mxu0
  %v531 = vadd.f32 %v472, %v530
  %532 = vmatmul.f32.gmra.mxu0 %v298
  %v533 = vpop.f32.mrf.mxu0
  %v534 = vadd.f32 %v475, %v533
  %535 = vmatmul.f32.gmra.mxu0 %v301
  %v536 = vpop.f32.mrf.mxu0
  %v537 = vadd.f32 %v478, %v536
  %538 = vmatmul.f32.gmra.mxu0 %v304
  %v539 = vpop.f32.mrf.mxu0
  %v540 = vadd.f32 %v481, %v539
  %541 = vmatmul.f32.gmra.mxu0 %v307
  %v542 = vpop.f32.mrf.mxu0
  %v543 = vadd.f32 %v484, %v542
  %544 = vmatmul.f32.gmra.mxu0 %v310
  %v545 = vpop.f32.mrf.mxu0
  %v546 = vadd.f32 %v487, %v545
  %547 = vmatmul.f32.gmra.mxu0 %v313
  %v548 = vpop.f32.mrf.mxu0
  %v549 = vadd.f32 %v490, %v548
  %550 = vmatmul.f32.gmra.mxu0 %v316
  %v551 = vpop.f32.mrf.mxu0
  %v552 = vadd.f32 %v493, %v551
  %553 = vmatmul.f32.gmra.mxu0 %v319
  %v554 = vpop.f32.mrf.mxu0
  %v555 = vadd.f32 %v496, %v554
  %556 = vdwg.mxu0
  %557 = vmatpush.msra.mxu0 %v48
  %558 = vmatpush.msra.mxu0 %v46
  %559 = vmatpush.msra.mxu0 %v44
  %560 = vmatpush.msra.mxu0 %v42
  %561 = vmatpush.msra.mxu0 %v40
  %562 = vmatpush.msra.mxu0 %v38
  %563 = vmatpush.msra.mxu0 %v36
  %564 = vmatpush.msra.mxu0 %v34
  %565 = vmatpush.msra.mxu0 %v32
  %566 = vmatpush.msra.mxu0 %v30
  %567 = vmatpush.msra.mxu0 %v28
  %568 = vmatpush.msra.mxu0 %v26
  %569 = vmatpush.msra.mxu0 %v24
  %570 = vmatpush.msra.mxu0 %v22
  %571 = vmatpush.msra.mxu0 %v20
  %572 = vmatpush.msra.mxu0 %v18
  %573 = vmatmul.f32.gmra.mxu0 %v222
  %v574 = vpop.f32.mrf.mxu0
  %v575 = vadd.f32 0.0, %v574
  %576 = vmatmul.f32.gmra.mxu0 %v226
  %v577 = vpop.f32.mrf.mxu0
  %v578 = vadd.f32 0.0, %v577
  %579 = vmatmul.f32.gmra.mxu0 %v230
  %v580 = vpop.f32.mrf.mxu0
  %v581 = vadd.f32 0.0, %v580
  %582 = vmatmul.f32.gmra.mxu0 %v234
  %v583 = vpop.f32.mrf.mxu0
  %v584 = vadd.f32 0.0, %v583
  %585 = vmatmul.f32.gmra.mxu0 %v238
  %v586 = vpop.f32.mrf.mxu0
  %v587 = vadd.f32 0.0, %v586
  %588 = vmatmul.f32.gmra.mxu0 %v242
  %v589 = vpop.f32.mrf.mxu0
  %v590 = vadd.f32 0.0, %v589
  %591 = vmatmul.f32.gmra.mxu0 %v246
  %v592 = vpop.f32.mrf.mxu0
  %v593 = vadd.f32 0.0, %v592
  %594 = vmatmul.f32.gmra.mxu0 %v250
  %v595 = vpop.f32.mrf.mxu0
  %v596 = vadd.f32 0.0, %v595
  %597 = vmatmul.f32.gmra.mxu0 %v254
  %v598 = vpop.f32.mrf.mxu0
  %v599 = vadd.f32 0.0, %v598
  %600 = vmatmul.f32.gmra.mxu0 %v258
  %v601 = vpop.f32.mrf.mxu0
  %v602 = vadd.f32 0.0, %v601
  %603 = vmatmul.f32.gmra.mxu0 %v262
  %v604 = vpop.f32.mrf.mxu0
  %v605 = vadd.f32 0.0, %v604
  %606 = vmatmul.f32.gmra.mxu0 %v266
  %v607 = vpop.f32.mrf.mxu0
  %v608 = vadd.f32 0.0, %v607
  %609 = vmatmul.f32.gmra.mxu0 %v270
  %v610 = vpop.f32.mrf.mxu0
  %v611 = vadd.f32 0.0, %v610
  %612 = vmatmul.f32.gmra.mxu0 %v274
  %v613 = vpop.f32.mrf.mxu0
  %v614 = vadd.f32 0.0, %v613
  %615 = vdwg.mxu0
  %616 = vmatpush.msra.mxu0 %v80
  %617 = vmatpush.msra.mxu0 %v78
  %618 = vmatpush.msra.mxu0 %v76
  %619 = vmatpush.msra.mxu0 %v74
  %620 = vmatpush.msra.mxu0 %v72
  %621 = vmatpush.msra.mxu0 %v70
  %622 = vmatpush.msra.mxu0 %v68
  %623 = vmatpush.msra.mxu0 %v66
  %624 = vmatpush.msra.mxu0 %v64
  %625 = vmatpush.msra.mxu0 %v62
  %626 = vmatpush.msra.mxu0 %v60
  %627 = vmatpush.msra.mxu0 %v58
  %628 = vmatpush.msra.mxu0 %v56
  %629 = vmatpush.msra.mxu0 %v54
  %630 = vmatpush.msra.mxu0 %v52
  %631 = vmatpush.msra.mxu0 %v50
  %632 = vmatmul.f32.gmra.mxu0 %v223
  %v633 = vpop.f32.mrf.mxu0
  %v634 = vadd.f32 %v575, %v633
  %635 = vmatmul.f32.gmra.mxu0 %v227
  %v636 = vpop.f32.mrf.mxu0
  %v637 = vadd.f32 %v578, %v636
  %638 = vmatmul.f32.gmra.mxu0 %v231
  %v639 = vpop.f32.mrf.mxu0
  %v640 = vadd.f32 %v581, %v639
  %641 = vmatmul.f32.gmra.mxu0 %v235
  %v642 = vpop.f32.mrf.mxu0
  %v643 = vadd.f32 %v584, %v642
  %644 = vmatmul.f32.gmra.mxu0 %v239
  %v645 = vpop.f32.mrf.mxu0
  %v646 = vadd.f32 %v587, %v645
  %647 = vmatmul.f32.gmra.mxu0 %v243
  %v648 = vpop.f32.mrf.mxu0
  %v649 = vadd.f32 %v590, %v648
  %650 = vmatmul.f32.gmra.mxu0 %v247
  %v651 = vpop.f32.mrf.mxu0
  %v652 = vadd.f32 %v593, %v651
  %653 = vmatmul.f32.gmra.mxu0 %v251
  %v654 = vpop.f32.mrf.mxu0
  %v655 = vadd.f32 %v596, %v654
  %656 = vmatmul.f32.gmra.mxu0 %v255
  %v657 = vpop.f32.mrf.mxu0
  %v658 = vadd.f32 %v599, %v657
  %659 = vmatmul.f32.gmra.mxu0 %v259
  %v660 = vpop.f32.mrf.mxu0
  %v661 = vadd.f32 %v602, %v660
  %662 = vmatmul.f32.gmra.mxu0 %v263
  %v663 = vpop.f32.mrf.mxu0
  %v664 = vadd.f32 %v605, %v663
  %665 = vmatmul.f32.gmra.mxu0 %v267
  %v666 = vpop.f32.mrf.mxu0
  %v667 = vadd.f32 %v608, %v666
  %668 = vmatmul.f32.gmra.mxu0 %v271
  %v669 = vpop.f32.mrf.mxu0
  %v670 = vadd.f32 %v611, %v669
  %671 = vmatmul.f32.gmra.mxu0 %v275
  %v672 = vpop.f32.mrf.mxu0
  %v673 = vadd.f32 %v614, %v672
  %674 = vdwg.mxu0
  %675 = vmatpush.msra.mxu0 %v112
  %676 = vmatpush.msra.mxu0 %v110
  %677 = vmatpush.msra.mxu0 %v108
  %678 = vmatpush.msra.mxu0 %v106
  %679 = vmatpush.msra.mxu0 %v104
  %680 = vmatpush.msra.mxu0 %v102
  %681 = vmatpush.msra.mxu0 %v100
  %682 = vmatpush.msra.mxu0 %v98
  %683 = vmatpush.msra.mxu0 %v96
  %684 = vmatpush.msra.mxu0 %v94
  %685 = vmatpush.msra.mxu0 %v92
  %686 = vmatpush.msra.mxu0 %v90
  %687 = vmatpush.msra.mxu0 %v88
  %688 = vmatpush.msra.mxu0 %v86
  %689 = vmatpush.msra.mxu0 %v84
  %690 = vmatpush.msra.mxu0 %v82
  %691 = vmatmul.f32.gmra.mxu0 %v224
  %v692 = vpop.f32.mrf.mxu0
  %v693 = vadd.f32 %v634, %v692
  %694 = vmatmul.f32.gmra.mxu0 %v228
  %v695 = vpop.f32.mrf.mxu0
  %v696 = vadd.f32 %v637, %v695
  %697 = vmatmul.f32.gmra.mxu0 %v232
  %v698 = vpop.f32.mrf.mxu0
  %v699 = vadd.f32 %v640, %v698
  %700 = vmatmul.f32.gmra.mxu0 %v236
  %v701 = vpop.f32.mrf.mxu0
  %v702 = vadd.f32 %v643, %v701
  %703 = vmatmul.f32.gmra.mxu0 %v240
  %v704 = vpop.f32.mrf.mxu0
  %v705 = vadd.f32 %v646, %v704
  %706 = vmatmul.f32.gmra.mxu0 %v244
  %v707 = vpop.f32.mrf.mxu0
  %v708 = vadd.f32 %v649, %v707
  %709 = vmatmul.f32.gmra.mxu0 %v248
  %v710 = vpop.f32.mrf.mxu0
  %v711 = vadd.f32 %v652, %v710
  %712 = vmatmul.f32.gmra.mxu0 %v252
  %v713 = vpop.f32.mrf.mxu0
  %v714 = vadd.f32 %v655, %v713
  %715 = vmatmul.f32.gmra.mxu0 %v256
  %v716 = vpop.f32.mrf.mxu0
  %v717 = vadd.f32 %v658, %v716
  %718 = vmatmul.f32.gmra.mxu0 %v260
  %v719 = vpop.f32.mrf.mxu0
  %v720 = vadd.f32 %v661, %v719
  %721 = vmatmul.f32.gmra.mxu0 %v264
  %v722 = vpop.f32.mrf.mxu0
  %v723 = vadd.f32 %v664, %v722
  %724 = vmatmul.f32.gmra.mxu0 %v268
  %v725 = vpop.f32.mrf.mxu0
  %v726 = vadd.f32 %v667, %v725
  %727 = vmatmul.f32.gmra.mxu0 %v272
  %v728 = vpop.f32.mrf.mxu0
  %v729 = vadd.f32 %v670, %v728
  %730 = vmatmul.f32.gmra.mxu0 %v276
  %v731 = vpop.f32.mrf.mxu0
  %v732 = vadd.f32 %v673, %v731
  %733 = vdwg.mxu0
  %734 = vmatpush.msra.mxu0 0.0
  %735 = vmatpush.msra.mxu0 0.0
  %736 = vmatpush.msra.mxu0 0.0
  %737 = vmatpush.msra.mxu0 0.0
  %738 = vmatpush.msra.mxu0 %v136
  %739 = vmatpush.msra.mxu0 %v134
  %740 = vmatpush.msra.mxu0 %v132
  %741 = vmatpush.msra.mxu0 %v130
  %742 = vmatpush.msra.mxu0 %v128
  %743 = vmatpush.msra.mxu0 %v126
  %744 = vmatpush.msra.mxu0 %v124
  %745 = vmatpush.msra.mxu0 %v122
  %746 = vmatpush.msra.mxu0 %v120
  %747 = vmatpush.msra.mxu0 %v118
  %748 = vmatpush.msra.mxu0 %v116
  %749 = vmatpush.msra.mxu0 %v114
  %750 = vmatmul.f32.gmra.mxu0 %v280
  %v751 = vpop.f32.mrf.mxu0
  %v752 = vadd.f32 %v693, %v751
  %753 = vmatmul.f32.gmra.mxu0 %v283
  %v754 = vpop.f32.mrf.mxu0
  %v755 = vadd.f32 %v696, %v754
  %756 = vmatmul.f32.gmra.mxu0 %v286
  %v757 = vpop.f32.mrf.mxu0
  %v758 = vadd.f32 %v699, %v757
  %759 = vmatmul.f32.gmra.mxu0 %v289
  %v760 = vpop.f32.mrf.mxu0
  %v761 = vadd.f32 %v702, %v760
  %762 = vmatmul.f32.gmra.mxu0 %v292
  %v763 = vpop.f32.mrf.mxu0
  %v764 = vadd.f32 %v705, %v763
  %765 = vmatmul.f32.gmra.mxu0 %v295
  %v766 = vpop.f32.mrf.mxu0
  %v767 = vadd.f32 %v708, %v766
  %768 = vmatmul.f32.gmra.mxu0 %v298
  %v769 = vpop.f32.mrf.mxu0
  %v770 = vadd.f32 %v711, %v769
  %771 = vmatmul.f32.gmra.mxu0 %v301
  %v772 = vpop.f32.mrf.mxu0
  %v773 = vadd.f32 %v714, %v772
  %774 = vmatmul.f32.gmra.mxu0 %v304
  %v775 = vpop.f32.mrf.mxu0
  %v776 = vadd.f32 %v717, %v775
  %777 = vmatmul.f32.gmra.mxu0 %v307
  %v778 = vpop.f32.mrf.mxu0
  %v779 = vadd.f32 %v720, %v778
  %780 = vmatmul.f32.gmra.mxu0 %v310
  %v781 = vpop.f32.mrf.mxu0
  %v782 = vadd.f32 %v723, %v781
  %783 = vmatmul.f32.gmra.mxu0 %v313
  %v784 = vpop.f32.mrf.mxu0
  %v785 = vadd.f32 %v726, %v784
  %786 = vmatmul.f32.gmra.mxu0 %v316
  %v787 = vpop.f32.mrf.mxu0
  %v788 = vadd.f32 %v729, %v787
  %789 = vmatmul.f32.gmra.mxu0 %v319
  %v790 = vpop.f32.mrf.mxu0
  %v791 = vadd.f32 %v732, %v790
  %792 = vdwg.mxu0
  %vm793 = vcmask 556032
  %v794 = vsel %vm793, %v752, 0.0
  %v795 = vadd.f32 %v516, %v794
  %796 = vadd.xlane.f32.xlu0 %v795
  %v797 = vpop.xlane.xlu0 %796
  %v798 = vsel %vm793, %v755, 0.0
  %v799 = vadd.f32 %v519, %v798
  %800 = vadd.xlane.f32.xlu0 %v799
  %v801 = vpop.xlane.xlu0 %800
  %v802 = vsel %vm793, %v758, 0.0
  %v803 = vadd.f32 %v522, %v802
  %804 = vadd.xlane.f32.xlu0 %v803
  %v805 = vpop.xlane.xlu0 %804
  %v806 = vsel %vm793, %v761, 0.0
  %v807 = vadd.f32 %v525, %v806
  %808 = vadd.xlane.f32.xlu0 %v807
  %v809 = vpop.xlane.xlu0 %808
  %v810 = vsel %vm793, %v764, 0.0
  %v811 = vadd.f32 %v528, %v810
  %812 = vadd.xlane.f32.xlu0 %v811
  %v813 = vpop.xlane.xlu0 %812
  %v814 = vsel %vm793, %v767, 0.0
  %v815 = vadd.f32 %v531, %v814
  %816 = vadd.xlane.f32.xlu0 %v815
  %v817 = vpop.xlane.xlu0 %816
  %v818 = vsel %vm793, %v770, 0.0
  %v819 = vadd.f32 %v534, %v818
  %820 = vadd.xlane.f32.xlu0 %v819
  %v821 = vpop.xlane.xlu0 %820
  %v822 = vsel %vm793, %v773, 0.0
  %v823 = vadd.f32 %v537, %v822
  %824 = vadd.xlane.f32.xlu0 %v823
  %v825 = vpop.xlane.xlu0 %824
  %v826 = vsel %vm793, %v776, 0.0
  %v827 = vadd.f32 %v540, %v826
  %828 = vadd.xlane.f32.xlu0 %v827
  %v829 = vpop.xlane.xlu0 %828
  %v830 = vsel %vm793, %v779, 0.0
  %v831 = vadd.f32 %v543, %v830
  %832 = vadd.xlane.f32.xlu0 %v831
  %v833 = vpop.xlane.xlu0 %832
  %v834 = vsel %vm793, %v782, 0.0
  %v835 = vadd.f32 %v546, %v834
  %836 = vadd.xlane.f32.xlu0 %v835
  %v837 = vpop.xlane.xlu0 %836
  %v838 = vsel %vm793, %v785, 0.0
  %v839 = vadd.f32 %v549, %v838
  %840 = vadd.xlane.f32.xlu0 %v839
  %v841 = vpop.xlane.xlu0 %840
  %v842 = vsel %vm793, %v788, 0.0
  %v843 = vadd.f32 %v552, %v842
  %844 = vadd.xlane.f32.xlu0 %v843
  %v845 = vpop.xlane.xlu0 %844
  %v846 = vsel %vm793, %v791, 0.0
  %v847 = vadd.f32 %v555, %v846
  %848 = vadd.xlane.f32.xlu0 %v847
  %v849 = vpop.xlane.xlu0 %848
  %v850 = vmul.f32 %v516, %v516
  %v851 = vmul.f32 %v752, %v752
  %v852 = vmul.f32 %v519, %v519
  %v853 = vmul.f32 %v755, %v755
  %v854 = vmul.f32 %v522, %v522
  %v855 = vmul.f32 %v758, %v758
  %v856 = vmul.f32 %v525, %v525
  %v857 = vmul.f32 %v761, %v761
  %v858 = vmul.f32 %v528, %v528
  %v859 = vmul.f32 %v764, %v764
  %v860 = vmul.f32 %v531, %v531
  %v861 = vmul.f32 %v767, %v767
  %v862 = vmul.f32 %v534, %v534
  %v863 = vmul.f32 %v770, %v770
  %v864 = vmul.f32 %v537, %v537
  %v865 = vmul.f32 %v773, %v773
  %v866 = vmul.f32 %v540, %v540
  %v867 = vmul.f32 %v776, %v776
  %v868 = vmul.f32 %v543, %v543
  %v869 = vmul.f32 %v779, %v779
  %v870 = vmul.f32 %v546, %v546
  %v871 = vmul.f32 %v782, %v782
  %v872 = vmul.f32 %v549, %v549
  %v873 = vmul.f32 %v785, %v785
  %v874 = vmul.f32 %v552, %v552
  %v875 = vmul.f32 %v788, %v788
  %v876 = vmul.f32 %v555, %v555
  %v877 = vmul.f32 %v791, %v791
  %v878 = vsel %vm793, %v851, 0.0
  %v879 = vadd.f32 %v850, %v878
  %880 = vadd.xlane.f32.xlu0 %v879
  %v881 = vpop.xlane.xlu0 %880
  %v882 = vsel %vm793, %v853, 0.0
  %v883 = vadd.f32 %v852, %v882
  %884 = vadd.xlane.f32.xlu0 %v883
  %v885 = vpop.xlane.xlu0 %884
  %v886 = vsel %vm793, %v855, 0.0
  %v887 = vadd.f32 %v854, %v886
  %888 = vadd.xlane.f32.xlu0 %v887
  %v889 = vpop.xlane.xlu0 %888
  %v890 = vsel %vm793, %v857, 0.0
  %v891 = vadd.f32 %v856, %v890
  %892 = vadd.xlane.f32.xlu0 %v891
  %v893 = vpop.xlane.xlu0 %892
  %v894 = vsel %vm793, %v859, 0.0
  %v895 = vadd.f32 %v858, %v894
  %896 = vadd.xlane.f32.xlu0 %v895
  %v897 = vpop.xlane.xlu0 %896
  %v898 = vsel %vm793, %v861, 0.0
  %v899 = vadd.f32 %v860, %v898
  %900 = vadd.xlane.f32.xlu0 %v899
  %v901 = vpop.xlane.xlu0 %900
  %v902 = vsel %vm793, %v863, 0.0
  %v903 = vadd.f32 %v862, %v902
  %904 = vadd.xlane.f32.xlu0 %v903
  %v905 = vpop.xlane.xlu0 %904
  %v906 = vsel %vm793, %v865, 0.0
  %v907 = vadd.f32 %v864, %v906
  %908 = vadd.xlane.f32.xlu0 %v907
  %v909 = vpop.xlane.xlu0 %908
  %v910 = vsel %vm793, %v867, 0.0
  %v911 = vadd.f32 %v866, %v910
  %912 = vadd.xlane.f32.xlu0 %v911
  %v913 = vpop.xlane.xlu0 %912
  %v914 = vsel %vm793, %v869, 0.0
  %v915 = vadd.f32 %v868, %v914
  %916 = vadd.xlane.f32.xlu0 %v915
  %v917 = vpop.xlane.xlu0 %916
  %v918 = vsel %vm793, %v871, 0.0
  %v919 = vadd.f32 %v870, %v918
  %920 = vadd.xlane.f32.xlu0 %v919
  %v921 = vpop.xlane.xlu0 %920
  %v922 = vsel %vm793, %v873, 0.0
  %v923 = vadd.f32 %v872, %v922
  %924 = vadd.xlane.f32.xlu0 %v923
  %v925 = vpop.xlane.xlu0 %924
  %v926 = vsel %vm793, %v875, 0.0
  %v927 = vadd.f32 %v874, %v926
  %928 = vadd.xlane.f32.xlu0 %v927
  %v929 = vpop.xlane.xlu0 %928
  %v930 = vsel %vm793, %v877, 0.0
  %v931 = vadd.f32 %v876, %v930
  %932 = vadd.xlane.f32.xlu0 %v931
  %v933 = vpop.xlane.xlu0 %932
  %v934 = vmul.f32 %v797, 0.0051020407
  %v935 = vmul.f32 %v801, 0.0051020407
  %v936 = vmul.f32 %v805, 0.0051020407
  %v937 = vmul.f32 %v809, 0.0051020407
  %v938 = vmul.f32 %v813, 0.0051020407
  %v939 = vmul.f32 %v817, 0.0051020407
  %v940 = vmul.f32 %v821, 0.0051020407
  %v941 = vmul.f32 %v825, 0.0051020407
  %v942 = vmul.f32 %v829, 0.0051020407
  %v943 = vmul.f32 %v833, 0.0051020407
  %v944 = vmul.f32 %v837, 0.0051020407
  %v945 = vmul.f32 %v841, 0.0051020407
  %v946 = vmul.f32 %v845, 0.0051020407
  %v947 = vmul.f32 %v849, 0.0051020407
  %v948 = vmul.f32 %v881, 0.0051020407
  %v949 = vmul.f32 %v885, 0.0051020407
  %v950 = vmul.f32 %v889, 0.0051020407
  %v951 = vmul.f32 %v893, 0.0051020407
  %v952 = vmul.f32 %v897, 0.0051020407
  %v953 = vmul.f32 %v901, 0.0051020407
  %v954 = vmul.f32 %v905, 0.0051020407
  %v955 = vmul.f32 %v909, 0.0051020407
  %v956 = vmul.f32 %v913, 0.0051020407
  %v957 = vmul.f32 %v917, 0.0051020407
  %v958 = vmul.f32 %v921, 0.0051020407
  %v959 = vmul.f32 %v925, 0.0051020407
  %v960 = vmul.f32 %v929, 0.0051020407
  %v961 = vmul.f32 %v933, 0.0051020407
  %v962 = vmul.f32 %v934, %v934
  %v963 = vmul.f32 %v935, %v935
  %v964 = vmul.f32 %v936, %v936
  %v965 = vmul.f32 %v937, %v937
  %v966 = vmul.f32 %v938, %v938
  %v967 = vmul.f32 %v939, %v939
  %v968 = vmul.f32 %v940, %v940
  %v969 = vmul.f32 %v941, %v941
  %v970 = vmul.f32 %v942, %v942
  %v971 = vmul.f32 %v943, %v943
  %v972 = vmul.f32 %v944, %v944
  %v973 = vmul.f32 %v945, %v945
  %v974 = vmul.f32 %v946, %v946
  %v975 = vmul.f32 %v947, %v947
  %v976 = vsub.f32 %v948, %v962
  %v977 = vsub.f32 %v949, %v963
  %v978 = vsub.f32 %v950, %v964
  %v979 = vsub.f32 %v951, %v965
  %v980 = vsub.f32 %v952, %v966
  %v981 = vsub.f32 %v953, %v967
  %v982 = vsub.f32 %v954, %v968
  %v983 = vsub.f32 %v955, %v969
  %v984 = vsub.f32 %v956, %v970
  %v985 = vsub.f32 %v957, %v971
  %v986 = vsub.f32 %v958, %v972
  %v987 = vsub.f32 %v959, %v973
  %v988 = vsub.f32 %v960, %v974
  %v989 = vsub.f32 %v961, %v975
  %v990 = vmax.f32 %v976, 0.0
  %v991 = vmax.f32 %v977, 0.0
  %v992 = vmax.f32 %v978, 0.0
  %v993 = vmax.f32 %v979, 0.0
  %v994 = vmax.f32 %v980, 0.0
  %v995 = vmax.f32 %v981, 0.0
  %v996 = vmax.f32 %v982, 0.0
  %v997 = vmax.f32 %v983, 0.0
  %v998 = vmax.f32 %v984, 0.0
  %v999 = vmax.f32 %v985, 0.0
  %v1000 = vmax.f32 %v986, 0.0
  %v1001 = vmax.f32 %v987, 0.0
  %v1002 = vmax.f32 %v988, 0.0
  %v1003 = vmax.f32 %v989, 0.0
  %v1004 = vld [vmem:[%s3] sm:$0xff]
  %v1005 = vld [vmem:[%s3 + $0x8] sm:$0xff]
  %v1006 = vld [vmem:[%s3 + $0x10] sm:$0xff]
  %v1007 = vld [vmem:[%s3 + $0x18] sm:$0xff]
  %v1008 = vld [vmem:[%s3 + $0x20] sm:$0xff]
  %v1009 = vld [vmem:[%s3 + $0x28] sm:$0xff]
  %v1010 = vld [vmem:[%s3 + $0x30] sm:$0xff]
  %v1011 = vld [vmem:[%s3 + $0x38] sm:$0xff]
  %v1012 = vld [vmem:[%s3 + $0x40] sm:$0xff]
  %v1013 = vld [vmem:[%s3 + $0x48] sm:$0xff]
  %v1014 = vld [vmem:[%s3 + $0x50] sm:$0xff]
  %v1015 = vld [vmem:[%s3 + $0x58] sm:$0xff]
  %v1016 = vld [vmem:[%s3 + $0x60] sm:$0xff]
  %v1017 = vld [vmem:[%s3 + $0x68] sm:$0xff]
  %v1018 = vadd.f32 %v990, 1e-05
  %v1019 = vadd.f32 %v991, 1e-05
  %v1020 = vadd.f32 %v992, 1e-05
  %v1021 = vadd.f32 %v993, 1e-05
  %v1022 = vadd.f32 %v994, 1e-05
  %v1023 = vadd.f32 %v995, 1e-05
  %v1024 = vadd.f32 %v996, 1e-05
  %v1025 = vadd.f32 %v997, 1e-05
  %v1026 = vadd.f32 %v998, 1e-05
  %v1027 = vadd.f32 %v999, 1e-05
  %v1028 = vadd.f32 %v1000, 1e-05
  %v1029 = vadd.f32 %v1001, 1e-05
  %v1030 = vadd.f32 %v1002, 1e-05
  %v1031 = vadd.f32 %v1003, 1e-05
  %v1032 = vrsqrt.pop %v1018
  %v1033 = vmul.f32 %v1032, %v1018
  %v1034 = vmul.f32 %v1033, %v1032
  %v1035 = vmul.f32 0.5, %v1034
  %v1036 = vsub.f32 1.5, %v1035
  %v1037 = vmul.f32 %v1032, %v1036
  %vm1038 = vweird.f32 %v1018
  %vm1039 = vweird.f32 %v1032
  %vm1040 = vmor %vm1038, %vm1039
  %v1041 = vsel %vm1040, %v1032, %v1037
  %v1042 = vrsqrt.pop %v1019
  %v1043 = vmul.f32 %v1042, %v1019
  %v1044 = vmul.f32 %v1043, %v1042
  %v1045 = vmul.f32 0.5, %v1044
  %v1046 = vsub.f32 1.5, %v1045
  %v1047 = vmul.f32 %v1042, %v1046
  %vm1048 = vweird.f32 %v1019
  %vm1049 = vweird.f32 %v1042
  %vm1050 = vmor %vm1048, %vm1049
  %v1051 = vsel %vm1050, %v1042, %v1047
  %v1052 = vrsqrt.pop %v1020
  %v1053 = vmul.f32 %v1052, %v1020
  %v1054 = vmul.f32 %v1053, %v1052
  %v1055 = vmul.f32 0.5, %v1054
  %v1056 = vsub.f32 1.5, %v1055
  %v1057 = vmul.f32 %v1052, %v1056
  %vm1058 = vweird.f32 %v1020
  %vm1059 = vweird.f32 %v1052
  %vm1060 = vmor %vm1058, %vm1059
  %v1061 = vsel %vm1060, %v1052, %v1057
  %v1062 = vrsqrt.pop %v1021
  %v1063 = vmul.f32 %v1062, %v1021
  %v1064 = vmul.f32 %v1063, %v1062
  %v1065 = vmul.f32 0.5, %v1064
  %v1066 = vsub.f32 1.5, %v1065
  %v1067 = vmul.f32 %v1062, %v1066
  %vm1068 = vweird.f32 %v1021
  %vm1069 = vweird.f32 %v1062
  %vm1070 = vmor %vm1068, %vm1069
  %v1071 = vsel %vm1070, %v1062, %v1067
  %v1072 = vrsqrt.pop %v1022
  %v1073 = vmul.f32 %v1072, %v1022
  %v1074 = vmul.f32 %v1073, %v1072
  %v1075 = vmul.f32 0.5, %v1074
  %v1076 = vsub.f32 1.5, %v1075
  %v1077 = vmul.f32 %v1072, %v1076
  %vm1078 = vweird.f32 %v1022
  %vm1079 = vweird.f32 %v1072
  %vm1080 = vmor %vm1078, %vm1079
  %v1081 = vsel %vm1080, %v1072, %v1077
  %v1082 = vrsqrt.pop %v1023
  %v1083 = vmul.f32 %v1082, %v1023
  %v1084 = vmul.f32 %v1083, %v1082
  %v1085 = vmul.f32 0.5, %v1084
  %v1086 = vsub.f32 1.5, %v1085
  %v1087 = vmul.f32 %v1082, %v1086
  %vm1088 = vweird.f32 %v1023
  %vm1089 = vweird.f32 %v1082
  %vm1090 = vmor %vm1088, %vm1089
  %v1091 = vsel %vm1090, %v1082, %v1087
  %v1092 = vrsqrt.pop %v1024
  %v1093 = vmul.f32 %v1092, %v1024
  %v1094 = vmul.f32 %v1093, %v1092
  %v1095 = vmul.f32 0.5, %v1094
  %v1096 = vsub.f32 1.5, %v1095
  %v1097 = vmul.f32 %v1092, %v1096
  %vm1098 = vweird.f32 %v1024
  %vm1099 = vweird.f32 %v1092
  %vm1100 = vmor %vm1098, %vm1099
  %v1101 = vsel %vm1100, %v1092, %v1097
  %v1102 = vrsqrt.pop %v1025
  %v1103 = vmul.f32 %v1102, %v1025
  %v1104 = vmul.f32 %v1103, %v1102
  %v1105 = vmul.f32 0.5, %v1104
  %v1106 = vsub.f32 1.5, %v1105
  %v1107 = vmul.f32 %v1102, %v1106
  %vm1108 = vweird.f32 %v1025
  %vm1109 = vweird.f32 %v1102
  %vm1110 = vmor %vm1108, %vm1109
  %v1111 = vsel %vm1110, %v1102, %v1107
  %v1112 = vrsqrt.pop %v1026
  %v1113 = vmul.f32 %v1112, %v1026
  %v1114 = vmul.f32 %v1113, %v1112
  %v1115 = vmul.f32 0.5, %v1114
  %v1116 = vsub.f32 1.5, %v1115
  %v1117 = vmul.f32 %v1112, %v1116
  %vm1118 = vweird.f32 %v1026
  %vm1119 = vweird.f32 %v1112
  %vm1120 = vmor %vm1118, %vm1119
  %v1121 = vsel %vm1120, %v1112, %v1117
  %v1122 = vrsqrt.pop %v1027
  %v1123 = vmul.f32 %v1122, %v1027
  %v1124 = vmul.f32 %v1123, %v1122
  %v1125 = vmul.f32 0.5, %v1124
  %v1126 = vsub.f32 1.5, %v1125
  %v1127 = vmul.f32 %v1122, %v1126
  %vm1128 = vweird.f32 %v1027
  %vm1129 = vweird.f32 %v1122
  %vm1130 = vmor %vm1128, %vm1129
  %v1131 = vsel %vm1130, %v1122, %v1127
  %v1132 = vrsqrt.pop %v1028
  %v1133 = vmul.f32 %v1132, %v1028
  %v1134 = vmul.f32 %v1133, %v1132
  %v1135 = vmul.f32 0.5, %v1134
  %v1136 = vsub.f32 1.5, %v1135
  %v1137 = vmul.f32 %v1132, %v1136
  %vm1138 = vweird.f32 %v1028
  %vm1139 = vweird.f32 %v1132
  %vm1140 = vmor %vm1138, %vm1139
  %v1141 = vsel %vm1140, %v1132, %v1137
  %v1142 = vrsqrt.pop %v1029
  %v1143 = vmul.f32 %v1142, %v1029
  %v1144 = vmul.f32 %v1143, %v1142
  %v1145 = vmul.f32 0.5, %v1144
  %v1146 = vsub.f32 1.5, %v1145
  %v1147 = vmul.f32 %v1142, %v1146
  %vm1148 = vweird.f32 %v1029
  %vm1149 = vweird.f32 %v1142
  %vm1150 = vmor %vm1148, %vm1149
  %v1151 = vsel %vm1150, %v1142, %v1147
  %v1152 = vrsqrt.pop %v1030
  %v1153 = vmul.f32 %v1152, %v1030
  %v1154 = vmul.f32 %v1153, %v1152
  %v1155 = vmul.f32 0.5, %v1154
  %v1156 = vsub.f32 1.5, %v1155
  %v1157 = vmul.f32 %v1152, %v1156
  %vm1158 = vweird.f32 %v1030
  %vm1159 = vweird.f32 %v1152
  %vm1160 = vmor %vm1158, %vm1159
  %v1161 = vsel %vm1160, %v1152, %v1157
  %v1162 = vrsqrt.pop %v1031
  %v1163 = vmul.f32 %v1162, %v1031
  %v1164 = vmul.f32 %v1163, %v1162
  %v1165 = vmul.f32 0.5, %v1164
  %v1166 = vsub.f32 1.5, %v1165
  %v1167 = vmul.f32 %v1162, %v1166
  %vm1168 = vweird.f32 %v1031
  %vm1169 = vweird.f32 %v1162
  %vm1170 = vmor %vm1168, %vm1169
  %v1171 = vsel %vm1170, %v1162, %v1167
  %v1172 = vmul.f32 %v1004, %v1041
  %v1173 = vmul.f32 %v1005, %v1051
  %v1174 = vmul.f32 %v1006, %v1061
  %v1175 = vmul.f32 %v1007, %v1071
  %v1176 = vmul.f32 %v1008, %v1081
  %v1177 = vmul.f32 %v1009, %v1091
  %v1178 = vmul.f32 %v1010, %v1101
  %v1179 = vmul.f32 %v1011, %v1111
  %v1180 = vmul.f32 %v1012, %v1121
  %v1181 = vmul.f32 %v1013, %v1131
  %v1182 = vmul.f32 %v1014, %v1141
  %v1183 = vmul.f32 %v1015, %v1151
  %v1184 = vmul.f32 %v1016, %v1161
  %v1185 = vmul.f32 %v1017, %v1171
  %v1186 = vmul.f32 %v934, %v1172
  %v1187 = vmul.f32 %v935, %v1173
  %v1188 = vmul.f32 %v936, %v1174
  %v1189 = vmul.f32 %v937, %v1175
  %v1190 = vmul.f32 %v938, %v1176
  %v1191 = vmul.f32 %v939, %v1177
  %v1192 = vmul.f32 %v940, %v1178
  %v1193 = vmul.f32 %v941, %v1179
  %v1194 = vmul.f32 %v942, %v1180
  %v1195 = vmul.f32 %v943, %v1181
  %v1196 = vmul.f32 %v944, %v1182
  %v1197 = vmul.f32 %v945, %v1183
  %v1198 = vmul.f32 %v946, %v1184
  %v1199 = vmul.f32 %v947, %v1185
  %1214 = vrot.lane.b32.xlu0 %v1186, 1
  %v1215 = vpop.permute.xlu0 %1214
  %1216 = vrot.lane.b32.xlu0 %v1187, 1
  %v1217 = vpop.permute.xlu0 %1216
  %1218 = vrot.lane.b32.xlu0 %v1188, 1
  %v1219 = vpop.permute.xlu0 %1218
  %1220 = vrot.lane.b32.xlu0 %v1189, 1
  %v1221 = vpop.permute.xlu0 %1220
  %1222 = vrot.lane.b32.xlu0 %v1190, 1
  %v1223 = vpop.permute.xlu0 %1222
  %1224 = vrot.lane.b32.xlu0 %v1191, 1
  %v1225 = vpop.permute.xlu0 %1224
  %1226 = vrot.lane.b32.xlu0 %v1192, 1
  %v1227 = vpop.permute.xlu0 %1226
  %1228 = vrot.lane.b32.xlu0 %v1193, 1
  %v1229 = vpop.permute.xlu0 %1228
  %1230 = vrot.lane.b32.xlu0 %v1194, 1
  %v1231 = vpop.permute.xlu0 %1230
  %1232 = vrot.lane.b32.xlu0 %v1195, 1
  %v1233 = vpop.permute.xlu0 %1232
  %1234 = vrot.lane.b32.xlu0 %v1196, 1
  %v1235 = vpop.permute.xlu0 %1234
  %1236 = vrot.lane.b32.xlu0 %v1197, 1
  %v1237 = vpop.permute.xlu0 %1236
  %1238 = vrot.lane.b32.xlu0 %v1198, 1
  %v1239 = vpop.permute.xlu0 %1238
  %1240 = vrot.lane.b32.xlu0 %v1199, 1
  %v1241 = vpop.permute.xlu0 %1240
  %v1256 = vsub.f32 %v1004, %v1215
  %v1257 = vsub.f32 %v1005, %v1217
  %v1258 = vsub.f32 %v1006, %v1219
  %v1259 = vsub.f32 %v1007, %v1221
  %v1260 = vsub.f32 %v1008, %v1223
  %v1261 = vsub.f32 %v1009, %v1225
  %v1262 = vsub.f32 %v1010, %v1227
  %v1263 = vsub.f32 %v1011, %v1229
  %v1264 = vsub.f32 %v1012, %v1231
  %v1265 = vsub.f32 %v1013, %v1233
  %v1266 = vsub.f32 %v1014, %v1235
  %v1267 = vsub.f32 %v1015, %v1237
  %v1268 = vsub.f32 %v1016, %v1239
  %v1269 = vsub.f32 %v1017, %v1241
  %1271 = vset.pattern.permute.xlu0 0
  %1272 = vperm.xlu0 %1271, %v1172
  %v1273 = vpop.permute.xlu0 %1272
  %1276 = vset.pattern.permute.xlu0 0
  %1277 = vperm.xlu0 %1276, %v1173
  %v1278 = vpop.permute.xlu0 %1277
  %1281 = vset.pattern.permute.xlu0 0
  %1282 = vperm.xlu0 %1281, %v1174
  %v1283 = vpop.permute.xlu0 %1282
  %1286 = vset.pattern.permute.xlu0 0
  %1287 = vperm.xlu0 %1286, %v1175
  %v1288 = vpop.permute.xlu0 %1287
  %1291 = vset.pattern.permute.xlu0 0
  %1292 = vperm.xlu0 %1291, %v1176
  %v1293 = vpop.permute.xlu0 %1292
  %1296 = vset.pattern.permute.xlu0 0
  %1297 = vperm.xlu0 %1296, %v1177
  %v1298 = vpop.permute.xlu0 %1297
  %1301 = vset.pattern.permute.xlu0 0
  %1302 = vperm.xlu0 %1301, %v1178
  %v1303 = vpop.permute.xlu0 %1302
  %1306 = vset.pattern.permute.xlu0 0
  %1307 = vperm.xlu0 %1306, %v1179
  %v1308 = vpop.permute.xlu0 %1307
  %1311 = vset.pattern.permute.xlu0 0
  %1312 = vperm.xlu0 %1311, %v1180
  %v1313 = vpop.permute.xlu0 %1312
  %1316 = vset.pattern.permute.xlu0 0
  %1317 = vperm.xlu0 %1316, %v1181
  %v1318 = vpop.permute.xlu0 %1317
  %1321 = vset.pattern.permute.xlu0 0
  %1322 = vperm.xlu0 %1321, %v1182
  %v1323 = vpop.permute.xlu0 %1322
  %1326 = vset.pattern.permute.xlu0 0
  %1327 = vperm.xlu0 %1326, %v1183
  %v1328 = vpop.permute.xlu0 %1327
  %1331 = vset.pattern.permute.xlu0 0
  %1332 = vperm.xlu0 %1331, %v1184
  %v1333 = vpop.permute.xlu0 %1332
  %1336 = vset.pattern.permute.xlu0 0
  %1337 = vperm.xlu0 %1336, %v1185
  %v1338 = vpop.permute.xlu0 %1337
  %v1340 = vmul.f32 %v516, %v1273
  %v1341 = vmul.f32 %v752, %v1273
  %v1342 = vmul.f32 %v519, %v1278
  %v1343 = vmul.f32 %v755, %v1278
  %v1344 = vmul.f32 %v522, %v1283
  %v1345 = vmul.f32 %v758, %v1283
  %v1346 = vmul.f32 %v525, %v1288
  %v1347 = vmul.f32 %v761, %v1288
  %v1348 = vmul.f32 %v528, %v1293
  %v1349 = vmul.f32 %v764, %v1293
  %v1350 = vmul.f32 %v531, %v1298
  %v1351 = vmul.f32 %v767, %v1298
  %v1352 = vmul.f32 %v534, %v1303
  %v1353 = vmul.f32 %v770, %v1303
  %v1354 = vmul.f32 %v537, %v1308
  %v1355 = vmul.f32 %v773, %v1308
  %v1356 = vmul.f32 %v540, %v1313
  %v1357 = vmul.f32 %v776, %v1313
  %v1358 = vmul.f32 %v543, %v1318
  %v1359 = vmul.f32 %v779, %v1318
  %v1360 = vmul.f32 %v546, %v1323
  %v1361 = vmul.f32 %v782, %v1323
  %v1362 = vmul.f32 %v549, %v1328
  %v1363 = vmul.f32 %v785, %v1328
  %v1364 = vmul.f32 %v552, %v1333
  %v1365 = vmul.f32 %v788, %v1333
  %v1366 = vmul.f32 %v555, %v1338
  %v1367 = vmul.f32 %v791, %v1338
  %1369 = vset.pattern.permute.xlu0 1
  %1370 = vperm.xlu0 %1369, %v1256
  %v1371 = vpop.permute.xlu0 %1370
  %1374 = vset.pattern.permute.xlu0 1
  %1375 = vperm.xlu0 %1374, %v1257
  %v1376 = vpop.permute.xlu0 %1375
  %1379 = vset.pattern.permute.xlu0 1
  %1380 = vperm.xlu0 %1379, %v1258
  %v1381 = vpop.permute.xlu0 %1380
  %1384 = vset.pattern.permute.xlu0 1
  %1385 = vperm.xlu0 %1384, %v1259
  %v1386 = vpop.permute.xlu0 %1385
  %1389 = vset.pattern.permute.xlu0 1
  %1390 = vperm.xlu0 %1389, %v1260
  %v1391 = vpop.permute.xlu0 %1390
  %1394 = vset.pattern.permute.xlu0 1
  %1395 = vperm.xlu0 %1394, %v1261
  %v1396 = vpop.permute.xlu0 %1395
  %1399 = vset.pattern.permute.xlu0 1
  %1400 = vperm.xlu0 %1399, %v1262
  %v1401 = vpop.permute.xlu0 %1400
  %1404 = vset.pattern.permute.xlu0 1
  %1405 = vperm.xlu0 %1404, %v1263
  %v1406 = vpop.permute.xlu0 %1405
  %1409 = vset.pattern.permute.xlu0 1
  %1410 = vperm.xlu0 %1409, %v1264
  %v1411 = vpop.permute.xlu0 %1410
  %1414 = vset.pattern.permute.xlu0 1
  %1415 = vperm.xlu0 %1414, %v1265
  %v1416 = vpop.permute.xlu0 %1415
  %1419 = vset.pattern.permute.xlu0 1
  %1420 = vperm.xlu0 %1419, %v1266
  %v1421 = vpop.permute.xlu0 %1420
  %1424 = vset.pattern.permute.xlu0 1
  %1425 = vperm.xlu0 %1424, %v1267
  %v1426 = vpop.permute.xlu0 %1425
  %1429 = vset.pattern.permute.xlu0 1
  %1430 = vperm.xlu0 %1429, %v1268
  %v1431 = vpop.permute.xlu0 %1430
  %1434 = vset.pattern.permute.xlu0 1
  %1435 = vperm.xlu0 %1434, %v1269
  %v1436 = vpop.permute.xlu0 %1435
  %v1438 = vadd.f32 %v1340, %v1371
  %v1439 = vadd.f32 %v1341, %v1371
  %v1440 = vadd.f32 %v1342, %v1376
  %v1441 = vadd.f32 %v1343, %v1376
  %v1442 = vadd.f32 %v1344, %v1381
  %v1443 = vadd.f32 %v1345, %v1381
  %v1444 = vadd.f32 %v1346, %v1386
  %v1445 = vadd.f32 %v1347, %v1386
  %v1446 = vadd.f32 %v1348, %v1391
  %v1447 = vadd.f32 %v1349, %v1391
  %v1448 = vadd.f32 %v1350, %v1396
  %v1449 = vadd.f32 %v1351, %v1396
  %v1450 = vadd.f32 %v1352, %v1401
  %v1451 = vadd.f32 %v1353, %v1401
  %v1452 = vadd.f32 %v1354, %v1406
  %v1453 = vadd.f32 %v1355, %v1406
  %v1454 = vadd.f32 %v1356, %v1411
  %v1455 = vadd.f32 %v1357, %v1411
  %v1456 = vadd.f32 %v1358, %v1416
  %v1457 = vadd.f32 %v1359, %v1416
  %v1458 = vadd.f32 %v1360, %v1421
  %v1459 = vadd.f32 %v1361, %v1421
  %v1460 = vadd.f32 %v1362, %v1426
  %v1461 = vadd.f32 %v1363, %v1426
  %v1462 = vadd.f32 %v1364, %v1431
  %v1463 = vadd.f32 %v1365, %v1431
  %v1464 = vadd.f32 %v1366, %v1436
  %v1465 = vadd.f32 %v1367, %v1436
  %1466 = vst [vmem:[%s4] sm:$0xff] %v1438
  %1467 = vst.msk [vmem:[%s4 + $0x8] sm:$0xff] %vm793, %v1439
  %1468 = vst [vmem:[%s4 + $0x10] sm:$0xff] %v1440
  %1469 = vst.msk [vmem:[%s4 + $0x18] sm:$0xff] %vm793, %v1441
  %1470 = vst [vmem:[%s4 + $0x20] sm:$0xff] %v1442
  %1471 = vst.msk [vmem:[%s4 + $0x28] sm:$0xff] %vm793, %v1443
  %1472 = vst [vmem:[%s4 + $0x30] sm:$0xff] %v1444
  %1473 = vst.msk [vmem:[%s4 + $0x38] sm:$0xff] %vm793, %v1445
  %1474 = vst [vmem:[%s4 + $0x40] sm:$0xff] %v1446
  %1475 = vst.msk [vmem:[%s4 + $0x48] sm:$0xff] %vm793, %v1447
  %1476 = vst [vmem:[%s4 + $0x50] sm:$0xff] %v1448
  %1477 = vst.msk [vmem:[%s4 + $0x58] sm:$0xff] %vm793, %v1449
  %1478 = vst [vmem:[%s4 + $0x60] sm:$0xff] %v1450
  %1479 = vst.msk [vmem:[%s4 + $0x68] sm:$0xff] %vm793, %v1451
  %1480 = vst [vmem:[%s4 + $0x70] sm:$0xff] %v1452
  %1481 = vst.msk [vmem:[%s4 + $0x78] sm:$0xff] %vm793, %v1453
  %1482 = vst [vmem:[%s4 + $0x80] sm:$0xff] %v1454
  %1483 = vst.msk [vmem:[%s4 + $0x88] sm:$0xff] %vm793, %v1455
  %1484 = vst [vmem:[%s4 + $0x90] sm:$0xff] %v1456
  %1485 = vst.msk [vmem:[%s4 + $0x98] sm:$0xff] %vm793, %v1457
  %1486 = vst [vmem:[%s4 + $0xa0] sm:$0xff] %v1458
  %1487 = vst.msk [vmem:[%s4 + $0xa8] sm:$0xff] %vm793, %v1459
  %1488 = vst [vmem:[%s4 + $0xb0] sm:$0xff] %v1460
  %1489 = vst.msk [vmem:[%s4 + $0xb8] sm:$0xff] %vm793, %v1461
  %1490 = vst [vmem:[%s4 + $0xc0] sm:$0xff] %v1462
  %1491 = vst.msk [vmem:[%s4 + $0xc8] sm:$0xff] %vm793, %v1463
  %1492 = vst [vmem:[%s4 + $0xd0] sm:$0xff] %v1464
  %1493 = vst.msk [vmem:[%s4 + $0xd8] sm:$0xff] %vm793, %v1465
  // Predicated region
  $region18: #{tpu_custom_call.1} parent=0 // pred_check
    _
  $region19: #{tpu_custom_call.1} parent=0 // pred_check_branch
    %1495 = sbr.rel (0) target = $region21
  $region20: #{tpu_custom_call.1} parent=0 // pred_region
    _
  $region21: #{tpu_custom_call.1} parent=0 // pred_fallthru
    _
  // Predicated region
  $region22: #{tpu_custom_call.1} parent=0 // pred_check
    _
  $region23: #{tpu_custom_call.1} parent=0 // pred_check_branch
    %1497 = sbr.rel (0) target = $region25
  $region24: #{tpu_custom_call.1} parent=0 // pred_region
    _
  $region25: #{tpu_custom_call.1} parent=0 // pred_fallthru
    _

</llo_original>
